<compile_context>
chip_gen: v5e
topology: v5e:2x2
jax: 0.10.0
libtpu: 0.0.40
codegen_flags: <defaults>
</compile_context>

<pallas_src>
import jax
import jax.numpy as jnp
from jax.experimental import pallas as pl
from jax.experimental.pallas import tpu as pltpu

EPS = 1e-5
LANE = 128
VMEM_BUDGET = 40 * 1024 * 1024       # footprint target (fits v7x 64 MiB VMEM)
VMEM_LIMIT_BYTES = 48 * 1024 * 1024  # explicit scoped limit (v5e default is 16 MiB)

_CP = pltpu.CompilerParams(dimension_semantics=("parallel",),
                           vmem_limit_bytes=VMEM_LIMIT_BYTES)


def _round_up(n, m):
    return ((n + m - 1) // m) * m


# --------------------------------------------------------------- kernel math
def _shifted_taps(x_f32):
    """Return (x[l-1], x[l+1]) shifted copies of a (TN, L, C) f32 tile.

    pltpu.roll (XLU slot) + a cheap (1, L, 1) iota select for the boundaries —
    no zero-pad/concatenate/slice copies and no full-tile mask arithmetic.
    """
    _, l, _ = x_f32.shape
    pos = jax.lax.broadcasted_iota(jnp.int32, (1, l, 1), 1)
    x_m = jnp.where(pos >= 1, pltpu.roll(x_f32, shift=1, axis=1), 0.0)
    x_p = jnp.where(pos <= l - 2, pltpu.roll(x_f32, shift=l - 1, axis=1), 0.0)
    return x_m, x_p


def _mm(a3_f32, w2_bf16):
    """(TN, L, Cin) f32 x (Cin, Cout) bf16 -> (TN*L, Cout) f32 on the MXU."""
    tn, l, cin = a3_f32.shape
    return jnp.dot(a3_f32.reshape(tn * l, cin).astype(jnp.bfloat16), w2_bf16,
                   preferred_element_type=jnp.float32)


def _colsum(y2d):
    """Per-channel sum and sum of squares of a (rows, C) f32 tile."""
    return (jnp.sum(y2d, axis=0, keepdims=True),
            jnp.sum(y2d * y2d, axis=0, keepdims=True))


# ------------------------------------------------------------------ pass 1
def _pass1_proj_kernel(x_ref, w02_ref, wcsc_ref,
                       y1_ref, s1_ref, q1_ref, ssc_ref, qsc_ref):
    """conv1 (k=3) with the 1x1 shortcut fused into the center-tap matmul.

    Emits y1 in bf16 and per-tile partial stats for y1 and ysc; ysc itself is
    NOT stored (recomputed in pass 3)."""
    tn, l, cin = x_ref.shape
    cout = w02_ref.shape[2]
    x = x_ref[...]
    x_m, x_p = _shifted_taps(x)

    ctr = _mm(x, wcsc_ref[...])                       # (rows, 2*Cout): [y1c|ysc]
    y1 = ctr[:, :cout] + _mm(x_m, w02_ref[0]) + _mm(x_p, w02_ref[1])
    ysc = ctr[:, cout:]

    y1_ref[...] = y1.reshape(tn, l, cout).astype(y1_ref.dtype)
    s, q = _colsum(y1)
    s1_ref[...] = s.reshape(1, 1, cout)
    q1_ref[...] = q.reshape(1, 1, cout)
    s, q = _colsum(ysc)
    ssc_ref[...] = s.reshape(1, 1, cout)
    qsc_ref[...] = q.reshape(1, 1, cout)


def _pass1_id_kernel(x_ref, w1_ref, y1_ref, s1_ref, q1_ref):
    tn, l, _ = x_ref.shape
    cout = w1_ref.shape[2]
    x = x_ref[...]
    x_m, x_p = _shifted_taps(x)
    y1 = _mm(x_m, w1_ref[0]) + _mm(x, w1_ref[1]) + _mm(x_p, w1_ref[2])
    y1_ref[...] = y1.reshape(tn, l, cout).astype(y1_ref.dtype)
    s, q = _colsum(y1)
    s1_ref[...] = s.reshape(1, 1, cout)
    q1_ref[...] = q.reshape(1, 1, cout)


# ------------------------------------------------------------------ pass 2
def _pass2_kernel(y1_ref, sc1_ref, sh1_ref, w2_ref, y2_ref, s2_ref, q2_ref):
    """bn1 (pre-folded scale/shift, f32) + relu + conv2 (k=3) + partial stats."""
    tn, l, c = y1_ref.shape
    h2d = jnp.maximum(
        y1_ref[...].astype(jnp.float32).reshape(tn * l, c) * sc1_ref[...]
        + sh1_ref[...], 0.0)
    h = h2d.reshape(tn, l, c)
    h_m, h_p = _shifted_taps(h)
    y2 = _mm(h_m, w2_ref[0]) + _mm(h, w2_ref[1]) + _mm(h_p, w2_ref[2])
    y2_ref[...] = y2.reshape(tn, l, c).astype(y2_ref.dtype)
    s, q = _colsum(y2)
    s2_ref[...] = s.reshape(1, 1, c)
    q2_ref[...] = q.reshape(1, 1, c)


# ------------------------------------------------------------------ pass 3
def _pass3_proj_kernel(y2_ref, sc2_ref, sh2_ref, x_ref, wsc_ref, scs_ref,
                       shs_ref, out_ref):
    """bn2 + (recomputed 1x1 shortcut conv + shortcut bn) + add + relu."""
    tn, l, c = y2_ref.shape
    rows = tn * l
    h = y2_ref[...].astype(jnp.float32).reshape(rows, c) * sc2_ref[...] \
        + sh2_ref[...]
    ysc = _mm(x_ref[...], wsc_ref[...])               # recompute, no HBM round-trip
    s = ysc * scs_ref[...] + shs_ref[...]
    out_ref[...] = jnp.maximum(h + s, 0.0).reshape(tn, l, c).astype(out_ref.dtype)


def _pass3_id_kernel(y2_ref, sc2_ref, sh2_ref, x_ref, out_ref):
    tn, l, c = y2_ref.shape
    rows = tn * l
    h = y2_ref[...].astype(jnp.float32).reshape(rows, c) * sc2_ref[...] \
        + sh2_ref[...]
    s = x_ref[...].reshape(rows, c)
    out_ref[...] = jnp.maximum(h + s, 0.0).reshape(tn, l, c).astype(out_ref.dtype)


# -------------------------------------------------------------------- wrapper
def _fold_bn(s, q, gamma, beta, count):
    """sum / sum^2 -> folded per-channel (scale, shift). Biased variance
    (PyTorch train-mode forward).  Dead lanes have gamma==0 -> scale==0."""
    mean = s / count
    var = jnp.maximum(q / count - mean * mean, 0.0)
    scale = gamma * jax.lax.rsqrt(var + EPS)
    return scale, beta - mean * scale


def residual_block_nlc(x_nlc, params, stride=1, block_n=None, trim_channels=True):
    """Channels-last entry point. x_nlc: (N, L, Cin) f32 -> (N, L, Cout) f32.

    When chaining blocks, pass trim_channels=False and keep the padded
    (N, L, CoutP) tensor between layers to avoid per-block slice copies."""
    assert stride == 1, "only stride=1 is supported"
    N, L, Cin = x_nlc.shape
    Cout = params["w1"].shape[2]
    use_proj = (stride != 1) or (Cin != Cout)
    assert L % 8 == 0, "L must be a multiple of 8"

    CinP = _round_up(max(Cin, LANE), LANE)
    CoutP = _round_up(max(Cout, LANE), LANE)
    if not use_proj:
        assert CinP == CoutP  # identity shortcut requires matching channels

    # ---- tile-size selection: biggest batch tile whose double-buffered
    #      footprint fits the VMEM budget (weights counted double-buffered).
    def footprint(tn):
        rows = tn * L
        if use_proj:
            w_p1 = 2 * (4 * CinP * CoutP * 2)             # (2,Ci,Co)+(Ci,2Co) bf16
            w_p3 = 2 * (CinP * CoutP * 2)
        else:
            w_p1 = 2 * (3 * CinP * CoutP * 2)
            w_p3 = 0
        p1 = 2 * rows * (4 * CinP + 2 * CoutP) + w_p1
        p2 = 2 * rows * (2 * CoutP + 2 * CoutP) + 2 * (3 * CoutP * CoutP * 2)
        p3 = 2 * rows * (2 * CoutP + 4 * CinP + 4 * CoutP) + w_p3
        return max(p1, p2, p3)

    if block_n is None:
        TN = 1
        for d in range(1, N + 1):
            if N % d == 0 and footprint(d) <= VMEM_BUDGET:
                TN = d
    else:
        TN = max(1, min(block_n, N))
        assert N % TN == 0, "block_n must divide N"
    grid = (N // TN,)
    G = N // TN

    # ---- pad operands (channels -> lane width); weights to bf16 MXU operands
    x_p = jnp.pad(x_nlc.astype(jnp.float32), ((0, 0), (0, 0), (0, CinP - Cin)))

    def pad_w(w, ci_to, co_to):
        pad = [(0, 0)] * (w.ndim - 2) + [(0, ci_to - w.shape[-2]),
                                         (0, co_to - w.shape[-1])]
        return jnp.pad(w.astype(jnp.float32), pad).astype(jnp.bfloat16)

    def pad_gb(v):  # zero-pad gamma AND beta -> padded lanes are inert
        return jnp.pad(v.astype(jnp.float32), ((0, 0), (0, CoutP - Cout)))

    w1 = pad_w(params["w1"], CinP, CoutP)      # (3, CinP, CoutP) bf16
    w2 = pad_w(params["w2"], CoutP, CoutP)     # (3, CoutP, CoutP) bf16
    g1, b1 = pad_gb(params["g1"]), pad_gb(params["b1"])
    g2, b2 = pad_gb(params["g2"]), pad_gb(params["b2"])

    # ---- specs
    def act_spec(c):
        return pl.BlockSpec((TN, L, c), lambda n: (n, 0, 0))

    def full_spec(shape):
        nd = len(shape)
        return pl.BlockSpec(shape, lambda n, _nd=nd: (0,) * _nd)

    part_spec = pl.BlockSpec((1, 1, CoutP), lambda n: (n, 0, 0))
    part_shape = jax.ShapeDtypeStruct((G, 1, CoutP), jnp.float32)
    ss_spec = pl.BlockSpec((1, CoutP), lambda n: (0, 0))   # folded scale/shift
    y_shape = jax.ShapeDtypeStruct((N, L, CoutP), jnp.bfloat16)
    out_shape = jax.ShapeDtypeStruct((N, L, CoutP), jnp.float32)
    count = float(N * L)

    # ---- pass 1: conv1 (+ fused shortcut conv stats) + partial stats
    if use_proj:
        wsc = pad_w(params["wsc"], CinP, CoutP)             # (CinP, CoutP) bf16
        gsc, bsc = pad_gb(params["gsc"]), pad_gb(params["bsc"])
        w02 = jnp.stack([w1[0], w1[2]], axis=0)              # taps 0 and 2
        wcsc = jnp.concatenate([w1[1], wsc], axis=-1)         # center tap | wsc
        y1, s1p, q1p, sscp, qscp = pl.pallas_call(
            _pass1_proj_kernel,
            grid=grid,
            in_specs=[act_spec(CinP), full_spec((2, CinP, CoutP)),
                      full_spec((CinP, 2 * CoutP))],
            out_specs=(act_spec(CoutP), part_spec, part_spec, part_spec,
                       part_spec),
            out_shape=(y_shape, part_shape, part_shape, part_shape, part_shape),
            compiler_params=_CP,
        )(x_p, w02, wcsc)
    else:
        y1, s1p, q1p = pl.pallas_call(
            _pass1_id_kernel,
            grid=grid,
            in_specs=[act_spec(CinP), full_spec((3, CinP, CoutP))],
            out_specs=(act_spec(CoutP), part_spec, part_spec),
            out_shape=(y_shape, part_shape, part_shape),
            compiler_params=_CP,
        )(x_p, w1)

    sc1, sh1 = _fold_bn(jnp.sum(s1p, axis=0), jnp.sum(q1p, axis=0), g1, b1,
                        count)

    # ---- pass 2: bn1 + relu + conv2 + partial stats
    y2, s2p, q2p = pl.pallas_call(
        _pass2_kernel,
        grid=grid,
        in_specs=[act_spec(CoutP), ss_spec, ss_spec,
                  full_spec((3, CoutP, CoutP))],
        out_specs=(act_spec(CoutP), part_spec, part_spec),
        out_shape=(y_shape, part_shape, part_shape),
        compiler_params=_CP,
    )(y1, sc1, sh1, w2)

    sc2, sh2 = _fold_bn(jnp.sum(s2p, axis=0), jnp.sum(q2p, axis=0), g2, b2,
                        count)

    # ---- pass 3: bn2 + shortcut (+bn) + residual add + relu
    if use_proj:
        scs, shs = _fold_bn(jnp.sum(sscp, axis=0), jnp.sum(qscp, axis=0),
                            gsc, bsc, count)
        out_p = pl.pallas_call(
            _pass3_proj_kernel,
            grid=grid,
            in_specs=[act_spec(CoutP), ss_spec, ss_spec,
                      act_spec(CinP), full_spec((CinP, CoutP)),
                      ss_spec, ss_spec],
            out_specs=act_spec(CoutP),
            out_shape=out_shape,
            compiler_params=_CP,
        )(y2, sc2, sh2, x_p, wsc, scs, shs)
    else:
        out_p = pl.pallas_call(
            _pass3_id_kernel,
            grid=grid,
            in_specs=[act_spec(CoutP), ss_spec, ss_spec, act_spec(CoutP)],
            out_specs=act_spec(CoutP),
            out_shape=out_shape,
            compiler_params=_CP,
        )(y2, sc2, sh2, x_p)

    if trim_channels:
        return out_p[:, :, :Cout]
    return out_p


def residual_block(x_ncl, params, stride=1, block_n=None):
    """PyTorch-style interface: x_ncl (N, Cin, L) -> (N, Cout, L).

    NCL<->NLC transposes are boundary glue only; chain layers through
    residual_block_nlc(trim_channels=False) to avoid them entirely."""
    out_nlc = residual_block_nlc(jnp.transpose(x_ncl, (0, 2, 1)), params,
                                 stride=stride, block_n=block_n)
    return jnp.transpose(out_nlc, (0, 2, 1))


# ------------------------------------------------------- params / reference
def init_params(key, cin, cout):
    """Deterministic synthetic params. Conv weights stored as (K, Cin, Cout)
    (PyTorch (Cout, Cin, K) transposed for channels-last matmul)."""
    ks = jax.random.split(key, 8)
    f32 = jnp.float32
    return {
        "w1": 0.2 * jax.random.normal(ks[0], (3, cin, cout), f32),
        "g1": 1.0 + 0.1 * jax.random.normal(ks[1], (1, cout), f32),
        "b1": 0.1 * jax.random.normal(ks[2], (1, cout), f32),
        "w2": 0.2 * jax.random.normal(ks[3], (3, cout, cout), f32),
        "g2": 1.0 + 0.1 * jax.random.normal(ks[4], (1, cout), f32),
        "b2": 0.1 * jax.random.normal(ks[5], (1, cout), f32),
        "wsc": 0.2 * jax.random.normal(ks[6], (cin, cout), f32),
        "gsc": jnp.ones((1, cout), f32),
        "bsc": jnp.zeros((1, cout), f32),
    }


def residual_block_ref(x_ncl, params, stride=1):
    """Pure-JAX reference (same math, no Pallas)."""
    assert stride == 1
    x = jnp.transpose(x_ncl, (0, 2, 1)).astype(jnp.float32)         # (N, L, Cin)
    n, l, cin = x.shape
    cout = params["w1"].shape[2]
    use_proj = cin != cout

    def conv3(inp, w):
        zero = jnp.zeros((n, 1, inp.shape[2]), jnp.float32)
        xp = jnp.concatenate([zero, inp, zero], axis=1)
        return sum(jnp.einsum("nlc,cd->nld", xp[:, k:k + l, :], w[k],
                              precision=jax.lax.Precision.HIGHEST)
                   for k in range(3))

    def bn(h, g, b):
        m = jnp.mean(h, axis=(0, 1), keepdims=True)
        v = jnp.mean((h - m) ** 2, axis=(0, 1), keepdims=True)
        return (h - m) * jax.lax.rsqrt(v + EPS) * g.reshape(1, 1, -1) \
            + b.reshape(1, 1, -1)

    h = jax.nn.relu(bn(conv3(x, params["w1"]), params["g1"], params["b1"]))
    h = bn(conv3(h, params["w2"]), params["g2"], params["b2"])
    if use_proj:
        sc = bn(jnp.einsum("nlc,cd->nld", x, params["wsc"],
                           precision=jax.lax.Precision.HIGHEST),
                params["gsc"], params["bsc"])
    else:
        sc = x
    out = jax.nn.relu(h + sc)
    return jnp.transpose(out, (0, 2, 1))


# ----------------------------------------------------------------------- main
if __name__ == "__main__":
    key = jax.random.PRNGKey(0)
    kx, kp, kx2, kp2, kx3, kp3 = jax.random.split(key, 6)

    # tolerance: bf16 MXU operands + bf16 inter-pass stores vs HIGHEST-precision ref
    ATOL = RTOL = 3e-2

    # ---- projection-shortcut case (Cin != Cout)
    N, CIN, COUT, L = 2, 4, 8, 16
    x = jax.random.normal(kx, (N, CIN, L), jnp.float32)             # PyTorch NCL
    params = init_params(kp, CIN, COUT)
    out = jax.block_until_ready(residual_block(x, params, stride=1))
    ref = jax.block_until_ready(residual_block_ref(x, params))
    assert out.shape == (N, COUT, L), out.shape
    assert jnp.allclose(out, ref, atol=ATOL, rtol=RTOL), \
        float(jnp.max(jnp.abs(out - ref)))

    # ---- identity-shortcut case (Cin == Cout)
    C = 8
    x2 = jax.random.normal(kx2, (N, C, L), jnp.float32)
    params2 = init_params(kp2, C, C)
    out2 = jax.block_until_ready(residual_block(x2, params2, stride=1))
    ref2 = jax.block_until_ready(residual_block_ref(x2, params2))
    assert out2.shape == (N, C, L), out2.shape
    assert jnp.allclose(out2, ref2, atol=ATOL, rtol=RTOL), \
        float(jnp.max(jnp.abs(out2 - ref2)))

    # ---- multi-tile grid (exercises the per-tile partial-stats reduction)
    N3, CIN3, COUT3 = 4, 6, 16
    x3 = jax.random.normal(kx3, (N3, CIN3, L), jnp.float32)
    params3 = init_params(kp3, CIN3, COUT3)
    out3 = jax.block_until_ready(residual_block(x3, params3, stride=1,
                                                block_n=2))
    ref3 = jax.block_until_ready(residual_block_ref(x3, params3))
    assert out3.shape == (N3, COUT3, L), out3.shape
    assert jnp.allclose(out3, ref3, atol=ATOL, rtol=RTOL), \
        float(jnp.max(jnp.abs(out3 - ref3)))

    print("KERNEL_OK")
</pallas_src>

<mosaic_0001>
module attributes {stable_mosaic.version = 11 : i64} {
  func.func @_pass1_proj_kernel(%arg0: i32, %arg1: memref<2x16x128xf32, #tpu.memory_space<vmem>>, %arg2: memref<2x128x128xbf16, #tpu.memory_space<vmem>>, %arg3: memref<128x256xbf16, #tpu.memory_space<vmem>>, %arg4: memref<2x16x128xbf16, #tpu.memory_space<vmem>>, %arg5: memref<1x1x128xf32, #tpu.memory_space<vmem>>, %arg6: memref<1x1x128xf32, #tpu.memory_space<vmem>>, %arg7: memref<1x1x128xf32, #tpu.memory_space<vmem>>, %arg8: memref<1x1x128xf32, #tpu.memory_space<vmem>>) attributes {dimension_semantics = [#tpu.dimension_semantics<parallel>], iteration_bounds = array<i64: 1>, scalar_prefetch = 0 : i64, scratch_operands = 0 : i64, tpu.core_type = #tpu.core_type<tc>, window_params = [{transform_indices = @transform_0, window_bounds = array<i64: 2, 16, 128>}, {pipeline_mode = #tpu.pipeline_mode<synchronous>, transform_indices = @transform_1, window_bounds = array<i64: 2, 128, 128>}, {pipeline_mode = #tpu.pipeline_mode<synchronous>, transform_indices = @transform_2, window_bounds = array<i64: 128, 256>}, {transform_indices = @transform_3, window_bounds = array<i64: 2, 16, 128>}, {transform_indices = @transform_4, window_bounds = array<i64: 1, 1, 128>}, {transform_indices = @transform_5, window_bounds = array<i64: 1, 1, 128>}, {transform_indices = @transform_6, window_bounds = array<i64: 1, 1, 128>}, {transform_indices = @transform_7, window_bounds = array<i64: 1, 1, 128>}]} {
    %c0 = arith.constant 0 : index
    %c0_0 = arith.constant 0 : index
    %c0_1 = arith.constant 0 : index
    %0 = vector.load %arg1[%c0, %c0_0, %c0_1] : memref<2x16x128xf32, #tpu.memory_space<vmem>>, vector<2x16x128xf32>
    %1 = tpu.iota {dimensions = array<i32: 1>} : vector<1x16x1xi32>
    %c1_i32 = arith.constant 1 : i32
    %2 = vector.broadcast %c1_i32 : i32 to vector<1x16x1xi32>
    %3 = arith.cmpi sge, %1, %2 : vector<1x16x1xi32>
    %c1_i32_2 = arith.constant 1 : i32
    %4 = tpu.dynamic_rotate %0 by %c1_i32_2 dim 1 : vector<2x16x128xf32>, i32 -> vector<2x16x128xf32>
    %cst = arith.constant 0.000000e+00 : f32
    %5 = vector.shape_cast %3 : vector<1x16x1xi1> to vector<1x16x1xi1>
    %6 = vector.broadcast %5 : vector<1x16x1xi1> to vector<2x16x128xi1>
    %7 = vector.broadcast %cst : f32 to vector<2x16x128xf32>
    %8 = arith.select %6, %4, %7 : vector<2x16x128xi1>, vector<2x16x128xf32>
    %c14_i32 = arith.constant 14 : i32
    %9 = vector.broadcast %c14_i32 : i32 to vector<1x16x1xi32>
    %10 = arith.cmpi sle, %1, %9 : vector<1x16x1xi32>
    %c15_i32 = arith.constant 15 : i32
    %11 = tpu.dynamic_rotate %0 by %c15_i32 dim 1 : vector<2x16x128xf32>, i32 -> vector<2x16x128xf32>
    %cst_3 = arith.constant 0.000000e+00 : f32
    %12 = vector.shape_cast %10 : vector<1x16x1xi1> to vector<1x16x1xi1>
    %13 = vector.broadcast %12 : vector<1x16x1xi1> to vector<2x16x128xi1>
    %14 = vector.broadcast %cst_3 : f32 to vector<2x16x128xf32>
    %15 = arith.select %13, %11, %14 : vector<2x16x128xi1>, vector<2x16x128xf32>
    %c0_4 = arith.constant 0 : index
    %c0_5 = arith.constant 0 : index
    %16 = vector.load %arg3[%c0_4, %c0_5] : memref<128x256xbf16, #tpu.memory_space<vmem>>, vector<128x256xbf16>
    %17 = vector.shape_cast %0 : vector<2x16x128xf32> to vector<32x128xf32>
    %18 = arith.truncf %17 : vector<32x128xf32> to vector<32x128xbf16>
    %cst_6 = arith.constant dense<0.000000e+00> : vector<32x256xf32>
    %19 = tpu.matmul %18, %16, %cst_6 {dimension_numbers = #tpu.dot_dimension_numbers<[1], [0], [0], [1], [0, 0, 1, 1], [], []>} : vector<32x128xbf16>, vector<128x256xbf16>, vector<32x256xf32> -> vector<32x256xf32>
    %20 = vector.extract_strided_slice %19 {offsets = [0, 0], sizes = [32, 128], strides = [1, 1]} : vector<32x256xf32> to vector<32x128xf32>
    %c0_7 = arith.constant 0 : index
    %c0_8 = arith.constant 0 : index
    %c0_9 = arith.constant 0 : index
    %21 = vector.load %arg2[%c0_7, %c0_8, %c0_9] : memref<2x128x128xbf16, #tpu.memory_space<vmem>>, vector<1x128x128xbf16>
    %22 = vector.shape_cast %21 : vector<1x128x128xbf16> to vector<128x128xbf16>
    %23 = vector.shape_cast %8 : vector<2x16x128xf32> to vector<32x128xf32>
    %24 = arith.truncf %23 : vector<32x128xf32> to vector<32x128xbf16>
    %cst_10 = arith.constant dense<0.000000e+00> : vector<32x128xf32>
    %25 = tpu.matmul %24, %22, %cst_10 {dimension_numbers = #tpu.dot_dimension_numbers<[1], [0], [0], [1], [0, 0, 1, 1], [], []>} : vector<32x128xbf16>, vector<128x128xbf16>, vector<32x128xf32> -> vector<32x128xf32>
    %26 = arith.addf %20, %25 : vector<32x128xf32>
    %c1 = arith.constant 1 : index
    %c0_11 = arith.constant 0 : index
    %c0_12 = arith.constant 0 : index
    %27 = vector.load %arg2[%c1, %c0_11, %c0_12] : memref<2x128x128xbf16, #tpu.memory_space<vmem>>, vector<1x128x128xbf16>
    %28 = vector.shape_cast %27 : vector<1x128x128xbf16> to vector<128x128xbf16>
    %29 = vector.shape_cast %15 : vector<2x16x128xf32> to vector<32x128xf32>
    %30 = arith.truncf %29 : vector<32x128xf32> to vector<32x128xbf16>
    %cst_13 = arith.constant dense<0.000000e+00> : vector<32x128xf32>
    %31 = tpu.matmul %30, %28, %cst_13 {dimension_numbers = #tpu.dot_dimension_numbers<[1], [0], [0], [1], [0, 0, 1, 1], [], []>} : vector<32x128xbf16>, vector<128x128xbf16>, vector<32x128xf32> -> vector<32x128xf32>
    %32 = arith.addf %26, %31 : vector<32x128xf32>
    %33 = vector.extract_strided_slice %19 {offsets = [0, 128], sizes = [32, 128], strides = [1, 1]} : vector<32x256xf32> to vector<32x128xf32>
    %34 = vector.shape_cast %32 : vector<32x128xf32> to vector<2x16x128xf32>
    %35 = arith.truncf %34 : vector<2x16x128xf32> to vector<2x16x128xbf16>
    %c0_14 = arith.constant 0 : index
    %c0_15 = arith.constant 0 : index
    %c0_16 = arith.constant 0 : index
    %36 = vector.load %arg4[%c0_14, %c0_15, %c0_16] : memref<2x16x128xbf16, #tpu.memory_space<vmem>>, vector<2x16x128xbf16>
    tpu.vector_store %arg4[%c0_14, %c0_15, %c0_16], %35 {strides = array<i32>} : memref<2x16x128xbf16, #tpu.memory_space<vmem>>, vector<2x16x128xbf16>,
    %cst_17 = arith.constant dense<0.000000e+00> : vector<128xf32>
    %37 = vector.multi_reduction <add>, %32, %cst_17 [0] : vector<32x128xf32> to vector<128xf32>
    %38 = vector.shape_cast %37 : vector<128xf32> to vector<1x128xf32>
    %39 = arith.mulf %32, %32 : vector<32x128xf32>
    %cst_18 = arith.constant dense<0.000000e+00> : vector<128xf32>
    %40 = vector.multi_reduction <add>, %39, %cst_18 [0] : vector<32x128xf32> to vector<128xf32>
    %41 = vector.shape_cast %40 : vector<128xf32> to vector<1x128xf32>
    %42 = vector.shape_cast %38 : vector<1x128xf32> to vector<1x1x128xf32>
    %c0_19 = arith.constant 0 : index
    %c0_20 = arith.constant 0 : index
    %c0_21 = arith.constant 0 : index
    %43 = vector.load %arg5[%c0_19, %c0_20, %c0_21] : memref<1x1x128xf32, #tpu.memory_space<vmem>>, vector<1x1x128xf32>
    tpu.vector_store %arg5[%c0_19, %c0_20, %c0_21], %42 {strides = array<i32>} : memref<1x1x128xf32, #tpu.memory_space<vmem>>, vector<1x1x128xf32>,
    %44 = vector.shape_cast %41 : vector<1x128xf32> to vector<1x1x128xf32>
    %c0_22 = arith.constant 0 : index
    %c0_23 = arith.constant 0 : index
    %c0_24 = arith.constant 0 : index
    %45 = vector.load %arg6[%c0_22, %c0_23, %c0_24] : memref<1x1x128xf32, #tpu.memory_space<vmem>>, vector<1x1x128xf32>
    tpu.vector_store %arg6[%c0_22, %c0_23, %c0_24], %44 {strides = array<i32>} : memref<1x1x128xf32, #tpu.memory_space<vmem>>, vector<1x1x128xf32>,
    %cst_25 = arith.constant dense<0.000000e+00> : vector<128xf32>
    %46 = vector.multi_reduction <add>, %33, %cst_25 [0] : vector<32x128xf32> to vector<128xf32>
    %47 = vector.shape_cast %46 : vector<128xf32> to vector<1x128xf32>
    %48 = arith.mulf %33, %33 : vector<32x128xf32>
    %cst_26 = arith.constant dense<0.000000e+00> : vector<128xf32>
    %49 = vector.multi_reduction <add>, %48, %cst_26 [0] : vector<32x128xf32> to vector<128xf32>
    %50 = vector.shape_cast %49 : vector<128xf32> to vector<1x128xf32>
    %51 = vector.shape_cast %47 : vector<1x128xf32> to vector<1x1x128xf32>
    %c0_27 = arith.constant 0 : index
    %c0_28 = arith.constant 0 : index
    %c0_29 = arith.constant 0 : index
    %52 = vector.load %arg7[%c0_27, %c0_28, %c0_29] : memref<1x1x128xf32, #tpu.memory_space<vmem>>, vector<1x1x128xf32>
    tpu.vector_store %arg7[%c0_27, %c0_28, %c0_29], %51 {strides = array<i32>} : memref<1x1x128xf32, #tpu.memory_space<vmem>>, vector<1x1x128xf32>,
    %53 = vector.shape_cast %50 : vector<1x128xf32> to vector<1x1x128xf32>
    %c0_30 = arith.constant 0 : index
    %c0_31 = arith.constant 0 : index
    %c0_32 = arith.constant 0 : index
    %54 = vector.load %arg8[%c0_30, %c0_31, %c0_32] : memref<1x1x128xf32, #tpu.memory_space<vmem>>, vector<1x1x128xf32>
    tpu.vector_store %arg8[%c0_30, %c0_31, %c0_32], %53 {strides = array<i32>} : memref<1x1x128xf32, #tpu.memory_space<vmem>>, vector<1x1x128xf32>,
    return
  }
  func.func @transform_0(%arg0: i32) -> (i32, i32, i32) {
    %c0_i32 = arith.constant 0 : i32
    %c0_i32_0 = arith.constant 0 : i32
    %c0_i32_1 = arith.constant 0 : i32
    return %arg0, %c0_i32, %c0_i32_0 : i32, i32, i32
  }
  func.func @transform_1(%arg0: i32) -> (i32, i32, i32) {
    %c0_i32 = arith.constant 0 : i32
    %c0_i32_0 = arith.constant 0 : i32
    %c0_i32_1 = arith.constant 0 : i32
    %c0_i32_2 = arith.constant 0 : i32
    return %c0_i32, %c0_i32_0, %c0_i32_1 : i32, i32, i32
  }
  func.func @transform_2(%arg0: i32) -> (i32, i32) {
    %c0_i32 = arith.constant 0 : i32
    %c0_i32_0 = arith.constant 0 : i32
    %c0_i32_1 = arith.constant 0 : i32
    return %c0_i32, %c0_i32_0 : i32, i32
  }
  func.func @transform_3(%arg0: i32) -> (i32, i32, i32) {
    %c0_i32 = arith.constant 0 : i32
    %c0_i32_0 = arith.constant 0 : i32
    %c0_i32_1 = arith.constant 0 : i32
    return %arg0, %c0_i32, %c0_i32_0 : i32, i32, i32
  }
  func.func @transform_4(%arg0: i32) -> (i32, i32, i32) {
    %c0_i32 = arith.constant 0 : i32
    %c0_i32_0 = arith.constant 0 : i32
    %c0_i32_1 = arith.constant 0 : i32
    return %arg0, %c0_i32, %c0_i32_0 : i32, i32, i32
  }
  func.func @transform_5(%arg0: i32) -> (i32, i32, i32) {
    %c0_i32 = arith.constant 0 : i32
    %c0_i32_0 = arith.constant 0 : i32
    %c0_i32_1 = arith.constant 0 : i32
    return %arg0, %c0_i32, %c0_i32_0 : i32, i32, i32
  }
  func.func @transform_6(%arg0: i32) -> (i32, i32, i32) {
    %c0_i32 = arith.constant 0 : i32
    %c0_i32_0 = arith.constant 0 : i32
    %c0_i32_1 = arith.constant 0 : i32
    return %arg0, %c0_i32, %c0_i32_0 : i32, i32, i32
  }
  func.func @transform_7(%arg0: i32) -> (i32, i32, i32) {
    %c0_i32 = arith.constant 0 : i32
    %c0_i32_0 = arith.constant 0 : i32
    %c0_i32_1 = arith.constant 0 : i32
    return %arg0, %c0_i32, %c0_i32_0 : i32, i32, i32
  }
}

</mosaic_0001>

<llo_original>
// kernel: tpu_custom_call.1
$region0: #{tpu_custom_call.1}
  #allocation0 [shape = 'u32[]', space=smem, size = 0x4, offset = 0x4, fixed_abs, tag = 'smem constant byte address 0x4 - core index']
  #allocation1 [shape = 'u32[72,128]{1,0:T(1,128)}', space=vmem, size = 0x9000, scoped, tag = 'internal scratch']
  %s0 = inlined_call_operand.hbm [shape: f32[2,16,128], index: 0, kind: input, shape index: {}]
  %s1 = inlined_call_operand.hbm [shape: bf16[2,128,128], index: 1, kind: input, shape index: {}]
  %s2 = inlined_call_operand.hbm [shape: bf16[128,256], index: 2, kind: input, shape index: {}]
  %s3 = inlined_call_operand.hbm [shape: bf16[2,16,128], index: 3, kind: output, shape index: {0}]
  %s4 = inlined_call_operand.hbm [shape: f32[1,1,128], index: 4, kind: output, shape index: {1}]
  %s5 = inlined_call_operand.hbm [shape: f32[1,1,128], index: 5, kind: output, shape index: {2}]
  %s6 = inlined_call_operand.hbm [shape: f32[1,1,128], index: 6, kind: output, shape index: {3}]
  %s7 = inlined_call_operand.hbm [shape: f32[1,1,128], index: 7, kind: output, shape index: {4}]
  %8 = xla_tuple %s3, %s4, %s5, %s6, %s7
  %s9 = sld [smem:[#allocation0]]
  $region66: #{tpu_custom_call.1} parent=0
    _
  %s11 = ssub.s32 1, %s9
  %s12 = scalar_select 0, %s11, %s9
  $region1: #{tpu_custom_call.1} parent=0
    #allocation2 [shape = 'u8[16384]{0}', space=vmem, size = 0x4000, scoped, tag = 'input window, operand 0, single buffered']
    #allocation3 [shape = 's32[1]{0}', space=sflag, size = 0x4, scoped, tag = 'scoped memory for tpu_custom_call.1']
    #allocation4 [shape = 's32[1]{0}', space=sflag, size = 0x4, scoped, tag = 'scoped memory for tpu_custom_call.1']
    #allocation5 [shape = 'u8[65536]{0}', space=vmem, size = 0x10000, scoped, tag = 'input window, operand 1, single buffered']
    #allocation6 [shape = 's32[1]{0}', space=sflag, size = 0x4, scoped, tag = 'scoped memory for tpu_custom_call.1']
    #allocation7 [shape = 'u8[65536]{0}', space=vmem, size = 0x10000, scoped, tag = 'input window, operand 2, single buffered']
    #allocation8 [shape = 'u8[8192]{0}', space=vmem, size = 0x2000, scoped, tag = 'output window, operand 0, single buffered']
    #allocation9 [shape = 'u8[512]{0}', space=vmem, size = 0x400, scoped, tag = 'output window, operand 1, single buffered']
    #allocation10 [shape = 's32[1]{0}', space=sflag, size = 0x4, scoped, tag = 'scoped memory for tpu_custom_call.1']
    #allocation11 [shape = 'u8[512]{0}', space=vmem, size = 0x400, scoped, tag = 'output window, operand 2, single buffered']
    #allocation12 [shape = 'u8[512]{0}', space=vmem, size = 0x400, scoped, tag = 'output window, operand 3, single buffered']
    #allocation13 [shape = 's32[1]{0}', space=sflag, size = 0x4, scoped, tag = 'scoped memory for tpu_custom_call.1']
    #allocation14 [shape = 'u8[512]{0}', space=vmem, size = 0x400, scoped, tag = 'output window, operand 4, single buffered']
    %13 = vsyncpa [#allocation3], 0
    %14 = vsyncpa [#allocation6], 0
    %15 = vsyncpa [#allocation4], 0
    %16 = vsyncpa [#allocation10], 0
    %17 = vsyncpa [#allocation13], 0
    // Predicated region
    $region2: #{tpu_custom_call.1} parent=1 // pred_check
      _
    $region3: #{tpu_custom_call.1} parent=1 // pred_check_branch
      %19 = sbr.rel (0) target = $region5
    $region4: #{tpu_custom_call.1} parent=1 // pred_region
      %21 = vsyncadd [#allocation3], 0
      %s22 = sshll.u32 %s0, 4
      %s23 = int_to_ptr.hbm [resolvable:$true] %s22
      %s24 = sshll.u32 [#allocation2], 4
      %s25 = int_to_ptr.vmem [resolvable:$true] %s24
      %30 = dma.hbm_to_vmem [thread:$0]  %s23, 512, %s25, [#allocation3], 128, 128, 8
    $region5: #{tpu_custom_call.1} parent=1 // pred_fallthru
      _
    // Predicated region
    $region6: #{tpu_custom_call.1} parent=1 // pred_check
      _
    $region7: #{tpu_custom_call.1} parent=1 // pred_check_branch
      %32 = sbr.rel (0) target = $region9
    $region8: #{tpu_custom_call.1} parent=1 // pred_region
      %34 = vsyncadd [#allocation6], 0
      %s35 = sshll.u32 %s1, 4
      %s36 = int_to_ptr.hbm [resolvable:$true] %s35
      %s37 = sshll.u32 [#allocation5], 4
      %s38 = int_to_ptr.vmem [resolvable:$true] %s37
      %43 = dma.hbm_to_vmem [thread:$0]  %s36, 2048, %s38, [#allocation6], 64, 64, 4
    $region9: #{tpu_custom_call.1} parent=1 // pred_fallthru
      _
    // Predicated region
    $region10: #{tpu_custom_call.1} parent=1 // pred_check
      _
    $region11: #{tpu_custom_call.1} parent=1 // pred_check_branch
      %45 = sbr.rel (0) target = $region13
    $region12: #{tpu_custom_call.1} parent=1 // pred_region
      %47 = vsyncadd [#allocation6], 0
      %s48 = sshll.u32 %s2, 4
      %s49 = int_to_ptr.hbm [resolvable:$true] %s48
      %s50 = sshll.u32 [#allocation7], 4
      %s51 = int_to_ptr.vmem [resolvable:$true] %s50
      %56 = dma.hbm_to_vmem [thread:$0]  %s49, 2048, %s51, [#allocation6], 128, 128, 8
    $region13: #{tpu_custom_call.1} parent=1 // pred_fallthru
      _
    // Predicated region
    $region14: #{tpu_custom_call.1} parent=1 // pred_check
      _
    $region15: #{tpu_custom_call.1} parent=1 // pred_check_branch
      %58 = sbr.rel (0) target = $region17
    $region16: #{tpu_custom_call.1} parent=1 // pred_region
      %60 = dma.done [#allocation3], 512
    $region17: #{tpu_custom_call.1} parent=1 // pred_fallthru
      _
    // Predicated region
    $region18: #{tpu_custom_call.1} parent=1 // pred_check
      _
    $region19: #{tpu_custom_call.1} parent=1 // pred_check_branch
      %62 = sbr.rel (0) target = $region21
    $region20: #{tpu_custom_call.1} parent=1 // pred_region
      %64 = dma.done [#allocation6], 2048
    $region21: #{tpu_custom_call.1} parent=1 // pred_fallthru
      _
    // Predicated region
    $region22: #{tpu_custom_call.1} parent=1 // pred_check
      _
    $region23: #{tpu_custom_call.1} parent=1 // pred_check_branch
      %66 = sbr.rel (0) target = $region25
    $region24: #{tpu_custom_call.1} parent=1 // pred_region
      %68 = dma.done [#allocation6], 2048
    $region25: #{tpu_custom_call.1} parent=1 // pred_fallthru
      _
    %v69 = vld [vmem:[#allocation2] sm:$0xff]
    %v70 = vld [vmem:[#allocation2 + $0x8] sm:$0xff]
    %v71 = vld [vmem:[#allocation2 + $0x10] sm:$0xff]
    %v72 = vld [vmem:[#allocation2 + $0x18] sm:$0xff]
    %v73 = vlaneseq
    %v74 = vshrl.u32 %v73, 7
    %v75 = vadd.s32 %v74, 8
    %vm76 = vcmp.ge.s32.totalorder %v74, 1
    %vm77 = vcmp.ge.s32.totalorder %v75, 1
    %v78 = vrot.slane %v69, 7
    %v79 = vrot.slane %v71, 7
    %v80 = vrot.slane %v70, 7
    %v81 = vrot.slane %v72, 7
    %vm82 = vcmp.lt.s32.totalorder %v74, 1
    %v83 = vsel %vm82, %v78, %v80
    %v84 = vsel %vm82, %v79, %v81
    %v85 = vsel %vm82, %v80, %v78
    %v86 = vsel %vm82, %v81, %v79
    %v87 = vsel %vm76, 1, 0
    %v88 = vsel %vm77, 1, 0
    %vm89 = vcmp.eq.s32.totalorder %v87, 1
    %vm90 = vcmp.eq.s32.totalorder %v88, 1
    %v91 = vsel %vm89, %v85, 0.0
    %v92 = vsel %vm90, %v83, 0.0
    %v93 = vsel %vm89, %v86, 0.0
    %v94 = vsel %vm90, %v84, 0.0
    %vm95 = vcmp.le.s32.totalorder %v74, 14
    %vm96 = vcmp.le.s32.totalorder %v75, 14
    %v97 = vrot.slane %v69, 1
    %v98 = vrot.slane %v71, 1
    %v99 = vrot.slane %v70, 1
    %v100 = vrot.slane %v72, 1
    %vm101 = vcmp.lt.s32.totalorder %v74, 7
    %v102 = vsel %vm101, %v97, %v99
    %v103 = vsel %vm101, %v98, %v100
    %v104 = vsel %vm101, %v99, %v97
    %v105 = vsel %vm101, %v100, %v98
    %v106 = vsel %vm95, 1, 0
    %v107 = vsel %vm96, 1, 0
    %vm108 = vcmp.eq.s32.totalorder %v106, 1
    %vm109 = vcmp.eq.s32.totalorder %v107, 1
    %v110 = vsel %vm108, %v102, 0.0
    %v111 = vsel %vm109, %v104, 0.0
    %v112 = vsel %vm108, %v103, 0.0
    %v113 = vsel %vm109, %v105, 0.0
    %v114 = vld [vmem:[#allocation7] sm:$0xff]
    %v115 = vld [vmem:[#allocation7 + $0x8] sm:$0xff]
    %v116 = vld [vmem:[#allocation7 + $0x10] sm:$0xff]
    %v117 = vld [vmem:[#allocation7 + $0x18] sm:$0xff]
    %v118 = vld [vmem:[#allocation7 + $0x20] sm:$0xff]
    %v119 = vld [vmem:[#allocation7 + $0x28] sm:$0xff]
    %v120 = vld [vmem:[#allocation7 + $0x30] sm:$0xff]
    %v121 = vld [vmem:[#allocation7 + $0x38] sm:$0xff]
    %v122 = vld [vmem:[#allocation7 + $0x40] sm:$0xff]
    %v123 = vld [vmem:[#allocation7 + $0x48] sm:$0xff]
    %v124 = vld [vmem:[#allocation7 + $0x50] sm:$0xff]
    %v125 = vld [vmem:[#allocation7 + $0x58] sm:$0xff]
    %v126 = vld [vmem:[#allocation7 + $0x60] sm:$0xff]
    %v127 = vld [vmem:[#allocation7 + $0x68] sm:$0xff]
    %v128 = vld [vmem:[#allocation7 + $0x70] sm:$0xff]
    %v129 = vld [vmem:[#allocation7 + $0x78] sm:$0xff]
    %v130 = vpack.c.bf16 %v70, %v69
    %v131 = vpack.c.bf16 %v72, %v71
    %v148 = vunpack.c.l.b16 %v114
    %v149 = vunpack.c.h.b16 %v114
    %v150 = vunpack.c.l.b16 %v115
    %v151 = vunpack.c.h.b16 %v115
    %v152 = vunpack.c.l.b16 %v116
    %v153 = vunpack.c.h.b16 %v116
    %v154 = vunpack.c.l.b16 %v117
    %v155 = vunpack.c.h.b16 %v117
    %v156 = vunpack.c.l.b16 %v118
    %v157 = vunpack.c.h.b16 %v118
    %v158 = vunpack.c.l.b16 %v119
    %v159 = vunpack.c.h.b16 %v119
    %v160 = vunpack.c.l.b16 %v120
    %v161 = vunpack.c.h.b16 %v120
    %v162 = vunpack.c.l.b16 %v121
    %v163 = vunpack.c.h.b16 %v121
    %v164 = vunpack.c.l.b16 %v122
    %v165 = vunpack.c.h.b16 %v122
    %v166 = vunpack.c.l.b16 %v123
    %v167 = vunpack.c.h.b16 %v123
    %v168 = vunpack.c.l.b16 %v124
    %v169 = vunpack.c.h.b16 %v124
    %v170 = vunpack.c.l.b16 %v125
    %v171 = vunpack.c.h.b16 %v125
    %v172 = vunpack.c.l.b16 %v126
    %v173 = vunpack.c.h.b16 %v126
    %v174 = vunpack.c.l.b16 %v127
    %v175 = vunpack.c.h.b16 %v127
    %v176 = vunpack.c.l.b16 %v128
    %v177 = vunpack.c.h.b16 %v128
    %v178 = vunpack.c.l.b16 %v129
    %v179 = vunpack.c.h.b16 %v129
    %v180 = vpack.c.b16 %v150, %v148
    %v181 = vpack.c.b16 %v151, %v149
    %v182 = vpack.c.b16 %v154, %v152
    %v183 = vpack.c.b16 %v155, %v153
    %v184 = vpack.c.b16 %v158, %v156
    %v185 = vpack.c.b16 %v159, %v157
    %v186 = vpack.c.b16 %v162, %v160
    %v187 = vpack.c.b16 %v163, %v161
    %v188 = vpack.c.b16 %v166, %v164
    %v189 = vpack.c.b16 %v167, %v165
    %v190 = vpack.c.b16 %v170, %v168
    %v191 = vpack.c.b16 %v171, %v169
    %v192 = vpack.c.b16 %v174, %v172
    %v193 = vpack.c.b16 %v175, %v173
    %v194 = vpack.c.b16 %v178, %v176
    %v195 = vpack.c.b16 %v179, %v177
    %212 = vmatpush.bf16.msra.mxu0 %v194
    %213 = vmatpush.bf16.msra.mxu0 %v192
    %214 = vmatpush.bf16.msra.mxu0 %v190
    %215 = vmatpush.bf16.msra.mxu0 %v188
    %216 = vmatpush.bf16.msra.mxu0 %v186
    %217 = vmatpush.bf16.msra.mxu0 %v184
    %218 = vmatpush.bf16.msra.mxu0 %v182
    %219 = vmatpush.bf16.msra.mxu0 %v180
    %220 = vmatmul.bf16.gmra.mxu0 %v130
    %v221 = vpop.f32.mrf.mxu0
    %v222 = vadd.f32 0.0, %v221
    %v223 = vpop.f32.mrf.mxu0
    %v224 = vadd.f32 0.0, %v223
    %225 = vmatmul.bf16.gmra.mxu0 %v131
    %v226 = vpop.f32.mrf.mxu0
    %v227 = vadd.f32 0.0, %v226
    %v228 = vpop.f32.mrf.mxu0
    %v229 = vadd.f32 0.0, %v228
    %230 = vdwg.mxu0
    %231 = vmatpush.bf16.msra.mxu0 %v195
    %232 = vmatpush.bf16.msra.mxu0 %v193
    %233 = vmatpush.bf16.msra.mxu0 %v191
    %234 = vmatpush.bf16.msra.mxu0 %v189
    %235 = vmatpush.bf16.msra.mxu0 %v187
    %236 = vmatpush.bf16.msra.mxu0 %v185
    %237 = vmatpush.bf16.msra.mxu0 %v183
    %238 = vmatpush.bf16.msra.mxu0 %v181
    %239 = vmatmul.bf16.gmra.mxu0 %v130
    %v240 = vpop.f32.mrf.mxu0
    %v241 = vadd.f32 0.0, %v240
    %v242 = vpop.f32.mrf.mxu0
    %v243 = vadd.f32 0.0, %v242
    %244 = vmatmul.bf16.gmra.mxu0 %v131
    %v245 = vpop.f32.mrf.mxu0
    %v246 = vadd.f32 0.0, %v245
    %v247 = vpop.f32.mrf.mxu0
    %v248 = vadd.f32 0.0, %v247
    %249 = vdwg.mxu0
    %v250 = vld [vmem:[#allocation5] sm:$0xf]
    %v251 = vld [vmem:[#allocation5 + $0x4] sm:$0xf]
    %v252 = vld [vmem:[#allocation5 + $0x8] sm:$0xf]
    %v253 = vld [vmem:[#allocation5 + $0xc] sm:$0xf]
    %v254 = vld [vmem:[#allocation5 + $0x10] sm:$0xf]
    %v255 = vld [vmem:[#allocation5 + $0x14] sm:$0xf]
    %v256 = vld [vmem:[#allocation5 + $0x18] sm:$0xf]
    %v257 = vld [vmem:[#allocation5 + $0x1c] sm:$0xf]
    %v258 = vld [vmem:[#allocation5 + $0x20] sm:$0xf]
    %v259 = vld [vmem:[#allocation5 + $0x24] sm:$0xf]
    %v260 = vld [vmem:[#allocation5 + $0x28] sm:$0xf]
    %v261 = vld [vmem:[#allocation5 + $0x2c] sm:$0xf]
    %v262 = vld [vmem:[#allocation5 + $0x30] sm:$0xf]
    %v263 = vld [vmem:[#allocation5 + $0x34] sm:$0xf]
    %v264 = vld [vmem:[#allocation5 + $0x38] sm:$0xf]
    %v265 = vld [vmem:[#allocation5 + $0x3c] sm:$0xf]
    %v266 = vpack.c.bf16 %v92, %v91
    %v267 = vpack.c.bf16 %v94, %v93
    %v284 = vunpack.c.l.b16 %v250
    %v285 = vunpack.c.l.b16 %v251
    %v286 = vunpack.c.l.b16 %v252
    %v287 = vunpack.c.l.b16 %v253
    %v288 = vunpack.c.l.b16 %v254
    %v289 = vunpack.c.l.b16 %v255
    %v290 = vunpack.c.l.b16 %v256
    %v291 = vunpack.c.l.b16 %v257
    %v292 = vunpack.c.l.b16 %v258
    %v293 = vunpack.c.l.b16 %v259
    %v294 = vunpack.c.l.b16 %v260
    %v295 = vunpack.c.l.b16 %v261
    %v296 = vunpack.c.l.b16 %v262
    %v297 = vunpack.c.l.b16 %v263
    %v298 = vunpack.c.l.b16 %v264
    %v299 = vunpack.c.l.b16 %v265
    %v300 = vpack.c.b16 %v285, %v284
    %v301 = vpack.c.b16 %v287, %v286
    %v302 = vpack.c.b16 %v289, %v288
    %v303 = vpack.c.b16 %v291, %v290
    %v304 = vpack.c.b16 %v293, %v292
    %v305 = vpack.c.b16 %v295, %v294
    %v306 = vpack.c.b16 %v297, %v296
    %v307 = vpack.c.b16 %v299, %v298
    %316 = vmatpush.bf16.msra.mxu0 %v307
    %317 = vmatpush.bf16.msra.mxu0 %v306
    %318 = vmatpush.bf16.msra.mxu0 %v305
    %319 = vmatpush.bf16.msra.mxu0 %v304
    %320 = vmatpush.bf16.msra.mxu0 %v303
    %321 = vmatpush.bf16.msra.mxu0 %v302
    %322 = vmatpush.bf16.msra.mxu0 %v301
    %323 = vmatpush.bf16.msra.mxu0 %v300
    %324 = vmatmul.bf16.gmra.mxu0 %v266
    %v325 = vpop.f32.mrf.mxu0
    %v326 = vadd.f32 0.0, %v325
    %v327 = vpop.f32.mrf.mxu0
    %v328 = vadd.f32 0.0, %v327
    %329 = vmatmul.bf16.gmra.mxu0 %v267
    %v330 = vpop.f32.mrf.mxu0
    %v331 = vadd.f32 0.0, %v330
    %v332 = vpop.f32.mrf.mxu0
    %v333 = vadd.f32 0.0, %v332
    %334 = vdwg.mxu0
    %v335 = vadd.f32 %v222, %v326
    %v336 = vadd.f32 %v224, %v328
    %v337 = vadd.f32 %v227, %v331
    %v338 = vadd.f32 %v229, %v333
    %s339 = scalar_lea.vmem [#allocation5], 64
    %v340 = vld [vmem:[%s339] sm:$0xf]
    %v341 = vld [vmem:[%s339 + $0x4] sm:$0xf]
    %v342 = vld [vmem:[%s339 + $0x8] sm:$0xf]
    %v343 = vld [vmem:[%s339 + $0xc] sm:$0xf]
    %v344 = vld [vmem:[%s339 + $0x10] sm:$0xf]
    %v345 = vld [vmem:[%s339 + $0x14] sm:$0xf]
    %v346 = vld [vmem:[%s339 + $0x18] sm:$0xf]
    %v347 = vld [vmem:[%s339 + $0x1c] sm:$0xf]
    %v348 = vld [vmem:[%s339 + $0x20] sm:$0xf]
    %v349 = vld [vmem:[%s339 + $0x24] sm:$0xf]
    %v350 = vld [vmem:[%s339 + $0x28] sm:$0xf]
    %v351 = vld [vmem:[%s339 + $0x2c] sm:$0xf]
    %v352 = vld [vmem:[%s339 + $0x30] sm:$0xf]
    %v353 = vld [vmem:[%s339 + $0x34] sm:$0xf]
    %v354 = vld [vmem:[%s339 + $0x38] sm:$0xf]
    %v355 = vld [vmem:[%s339 + $0x3c] sm:$0xf]
    %v356 = vpack.c.bf16 %v111, %v110
    %v357 = vpack.c.bf16 %v113, %v112
    %v374 = vunpack.c.l.b16 %v340
    %v375 = vunpack.c.l.b16 %v341
    %v376 = vunpack.c.l.b16 %v342
    %v377 = vunpack.c.l.b16 %v343
    %v378 = vunpack.c.l.b16 %v344
    %v379 = vunpack.c.l.b16 %v345
    %v380 = vunpack.c.l.b16 %v346
    %v381 = vunpack.c.l.b16 %v347
    %v382 = vunpack.c.l.b16 %v348
    %v383 = vunpack.c.l.b16 %v349
    %v384 = vunpack.c.l.b16 %v350
    %v385 = vunpack.c.l.b16 %v351
    %v386 = vunpack.c.l.b16 %v352
    %v387 = vunpack.c.l.b16 %v353
    %v388 = vunpack.c.l.b16 %v354
    %v389 = vunpack.c.l.b16 %v355
    %v390 = vpack.c.b16 %v375, %v374
    %v391 = vpack.c.b16 %v377, %v376
    %v392 = vpack.c.b16 %v379, %v378
    %v393 = vpack.c.b16 %v381, %v380
    %v394 = vpack.c.b16 %v383, %v382
    %v395 = vpack.c.b16 %v385, %v384
    %v396 = vpack.c.b16 %v387, %v386
    %v397 = vpack.c.b16 %v389, %v388
    %406 = vmatpush.bf16.msra.mxu0 %v397
    %407 = vmatpush.bf16.msra.mxu0 %v396
    %408 = vmatpush.bf16.msra.mxu0 %v395
    %409 = vmatpush.bf16.msra.mxu0 %v394
    %410 = vmatpush.bf16.msra.mxu0 %v393
    %411 = vmatpush.bf16.msra.mxu0 %v392
    %412 = vmatpush.bf16.msra.mxu0 %v391
    %413 = vmatpush.bf16.msra.mxu0 %v390
    %414 = vmatmul.bf16.gmra.mxu0 %v356
    %v415 = vpop.f32.mrf.mxu0
    %v416 = vadd.f32 0.0, %v415
    %v417 = vpop.f32.mrf.mxu0
    %v418 = vadd.f32 0.0, %v417
    %419 = vmatmul.bf16.gmra.mxu0 %v357
    %v420 = vpop.f32.mrf.mxu0
    %v421 = vadd.f32 0.0, %v420
    %v422 = vpop.f32.mrf.mxu0
    %v423 = vadd.f32 0.0, %v422
    %424 = vdwg.mxu0
    %v425 = vadd.f32 %v335, %v416
    %v426 = vadd.f32 %v336, %v418
    %v427 = vadd.f32 %v337, %v421
    %v428 = vadd.f32 %v338, %v423
    %v429 = vpack.c.bf16 %v425, %v425
    %v430 = vpack.c.bf16 %v426, %v426
    %v431 = vpack.c.bf16 %v427, %v427
    %v432 = vpack.c.bf16 %v428, %v428
    %433 = vst [vmem:[#allocation8] sm:$0xf] %v429
    %434 = vst [vmem:[#allocation8 + $0x4] sm:$0xf] %v430
    %435 = vst [vmem:[#allocation8 + $0x8] sm:$0xf] %v431
    %436 = vst [vmem:[#allocation8 + $0xc] sm:$0xf] %v432
    %v437 = vadd.f32 %v425, %v426
    %v438 = vadd.f32 %v437, %v427
    %v439 = vadd.f32 %v438, %v428
    %v440 = vrot.slane %v439, 4
    %v441 = vadd.f32 %v439, %v440
    %v442 = vrot.slane %v441, 2
    %v443 = vadd.f32 %v441, %v442
    %v444 = vrot.slane %v443, 1
    %v445 = vadd.f32 %v443, %v444
    %v446 = vmul.f32 %v425, %v425
    %v447 = vmul.f32 %v426, %v426
    %v448 = vmul.f32 %v427, %v427
    %v449 = vmul.f32 %v428, %v428
    %v450 = vadd.f32 %v446, %v447
    %v451 = vadd.f32 %v450, %v448
    %v452 = vadd.f32 %v451, %v449
    %v453 = vrot.slane %v452, 4
    %v454 = vadd.f32 %v452, %v453
    %v455 = vrot.slane %v454, 2
    %v456 = vadd.f32 %v454, %v455
    %v457 = vrot.slane %v456, 1
    %v458 = vadd.f32 %v456, %v457
    %459 = vst [vmem:[#allocation9] sm:$0x1] %v445
    %460 = vst [vmem:[#allocation11] sm:$0x1] %v458
    %v461 = vadd.f32 %v241, %v243
    %v462 = vadd.f32 %v461, %v246
    %v463 = vadd.f32 %v462, %v248
    %v464 = vrot.slane %v463, 4
    %v465 = vadd.f32 %v463, %v464
    %v466 = vrot.slane %v465, 2
    %v467 = vadd.f32 %v465, %v466
    %v468 = vrot.slane %v467, 1
    %v469 = vadd.f32 %v467, %v468
    %v470 = vmul.f32 %v241, %v241
    %v471 = vmul.f32 %v243, %v243
    %v472 = vmul.f32 %v246, %v246
    %v473 = vmul.f32 %v248, %v248
    %v474 = vadd.f32 %v470, %v471
    %v475 = vadd.f32 %v474, %v472
    %v476 = vadd.f32 %v475, %v473
    %v477 = vrot.slane %v476, 4
    %v478 = vadd.f32 %v476, %v477
    %v479 = vrot.slane %v478, 2
    %v480 = vadd.f32 %v478, %v479
    %v481 = vrot.slane %v480, 1
    %v482 = vadd.f32 %v480, %v481
    %483 = vst [vmem:[#allocation12] sm:$0x1] %v469
    %484 = vst [vmem:[#allocation14] sm:$0x1] %v482
    // Predicated region
    $region26: #{tpu_custom_call.1} parent=1 // pred_check
      _
    $region27: #{tpu_custom_call.1} parent=1 // pred_check_branch
      %486 = sbr.rel (0) target = $region29
    $region28: #{tpu_custom_call.1} parent=1 // pred_region
      %488 = vsyncadd [#allocation4], 0
      %s489 = sshll.u32 [#allocation8], 4
      %s490 = int_to_ptr.vmem [resolvable:$true] %s489
      %s491 = sshll.u32 %s3, 4
      %s492 = int_to_ptr.hbm [resolvable:$true] %s491
      %497 = dma.vmem_to_hbm [thread:$0]  %s490, 256, %s492, [#allocation4], 64, 64, 4
    $region29: #{tpu_custom_call.1} parent=1 // pred_fallthru
      _
    // Predicated region
    $region30: #{tpu_custom_call.1} parent=1 // pred_check
      _
    $region31: #{tpu_custom_call.1} parent=1 // pred_check_branch
      %499 = sbr.rel (0) target = $region33
    $region32: #{tpu_custom_call.1} parent=1 // pred_region
      %501 = vsyncadd [#allocation10], 0
      %s503 = sshll.u32 [#allocation9], 4
      %s504 = int_to_ptr.vmem [resolvable:$true] %s503
      %s505 = sshll.u32 %s4, 4
      %s506 = int_to_ptr.hbm [resolvable:$true] %s505
      %508 = dma.vmem_to_hbm [thread:$0]  %s504, 16, %s506, [#allocation10]
    $region33: #{tpu_custom_call.1} parent=1 // pred_fallthru
      _
    // Predicated region
    $region34: #{tpu_custom_call.1} parent=1 // pred_check
      _
    $region35: #{tpu_custom_call.1} parent=1 // pred_check_branch
      %510 = sbr.rel (0) target = $region37
    $region36: #{tpu_custom_call.1} parent=1 // pred_region
      %512 = vsyncadd [#allocation10], 0
      %s514 = sshll.u32 [#allocation11], 4
      %s515 = int_to_ptr.vmem [resolvable:$true] %s514
      %s516 = sshll.u32 %s5, 4
      %s517 = int_to_ptr.hbm [resolvable:$true] %s516
      %519 = dma.vmem_to_hbm [thread:$0]  %s515, 16, %s517, [#allocation10]
    $region37: #{tpu_custom_call.1} parent=1 // pred_fallthru
      _
    // Predicated region
    $region38: #{tpu_custom_call.1} parent=1 // pred_check
      _
    $region39: #{tpu_custom_call.1} parent=1 // pred_check_branch
      %521 = sbr.rel (0) target = $region41
    $region40: #{tpu_custom_call.1} parent=1 // pred_region
      %523 = vsyncadd [#allocation13], 0
      %s525 = sshll.u32 [#allocation12], 4
      %s526 = int_to_ptr.vmem [resolvable:$true] %s525
      %s527 = sshll.u32 %s6, 4
      %s528 = int_to_ptr.hbm [resolvable:$true] %s527
      %530 = dma.vmem_to_hbm [thread:$0]  %s526, 16, %s528, [#allocation13]
    $region41: #{tpu_custom_call.1} parent=1 // pred_fallthru
      _
    // Predicated region
    $region42: #{tpu_custom_call.1} parent=1 // pred_check
      _
    $region43: #{tpu_custom_call.1} parent=1 // pred_check_branch
      %532 = sbr.rel (0) target = $region45
    $region44: #{tpu_custom_call.1} parent=1 // pred_region
      %534 = vsyncadd [#allocation13], 0
      %s536 = sshll.u32 [#allocation14], 4
      %s537 = int_to_ptr.vmem [resolvable:$true] %s536
      %s538 = sshll.u32 %s7, 4
      %s539 = int_to_ptr.hbm [resolvable:$true] %s538
      %541 = dma.vmem_to_hbm [thread:$0]  %s537, 16, %s539, [#allocation13]
    $region45: #{tpu_custom_call.1} parent=1 // pred_fallthru
      _
    // Predicated region
    $region46: #{tpu_custom_call.1} parent=1 // pred_check
      _
    $region47: #{tpu_custom_call.1} parent=1 // pred_check_branch
      %543 = sbr.rel (0) target = $region49
    $region48: #{tpu_custom_call.1} parent=1 // pred_region
      %545 = dma.done [#allocation4], 256
    $region49: #{tpu_custom_call.1} parent=1 // pred_fallthru
      _
    // Predicated region
    $region50: #{tpu_custom_call.1} parent=1 // pred_check
      _
    $region51: #{tpu_custom_call.1} parent=1 // pred_check_branch
      %547 = sbr.rel (0) target = $region53
    $region52: #{tpu_custom_call.1} parent=1 // pred_region
      %549 = dma.done [#allocation10], 16
    $region53: #{tpu_custom_call.1} parent=1 // pred_fallthru
      _
    // Predicated region
    $region54: #{tpu_custom_call.1} parent=1 // pred_check
      _
    $region55: #{tpu_custom_call.1} parent=1 // pred_check_branch
      %551 = sbr.rel (0) target = $region57
    $region56: #{tpu_custom_call.1} parent=1 // pred_region
      %553 = dma.done [#allocation10], 16
    $region57: #{tpu_custom_call.1} parent=1 // pred_fallthru
      _
    // Predicated region
    $region58: #{tpu_custom_call.1} parent=1 // pred_check
      _
    $region59: #{tpu_custom_call.1} parent=1 // pred_check_branch
      %555 = sbr.rel (0) target = $region61
    $region60: #{tpu_custom_call.1} parent=1 // pred_region
      %557 = dma.done [#allocation13], 16
    $region61: #{tpu_custom_call.1} parent=1 // pred_fallthru
      _
    // Predicated region
    $region62: #{tpu_custom_call.1} parent=1 // pred_check
      _
    $region63: #{tpu_custom_call.1} parent=1 // pred_check_branch
      %559 = sbr.rel (0) target = $region65
    $region64: #{tpu_custom_call.1} parent=1 // pred_region
      %561 = dma.done [#allocation13], 16
    $region65: #{tpu_custom_call.1} parent=1 // pred_fallthru
      _
    %562 = vsyncpa [#allocation3], 1
    %563 = vsyncpa [#allocation6], 1
    %564 = vsyncpa [#allocation4], 1
    %565 = vsyncpa [#allocation10], 1
    %566 = vsyncpa [#allocation13], 1

</llo_original>
